<compile_context>
chip_gen: v7x
topology: tpu7x:2x2x1
jax: 0.10.0
libtpu: 0.0.40
codegen_flags: <defaults>
</compile_context>

<pallas_src>
import functools

import jax
import jax.numpy as jnp
from jax.experimental import pallas as pl
from jax.experimental.pallas import tpu as pltpu


def _pos_enc_kernel(x_ref, pos_ref, o_ref, *, padding_idx):
    # x_ref: (TB, TS, E) block; pos_ref: (TS, E) block (broadcast over batch).
    x = x_ref[...]
    added = x + pos_ref[...][None, :, :]
    if padding_idx is not None:
        # NOTE: exact float equality against padding_idx — faithful to the
        # original PyTorch forward (documented as intentional).
        o_ref[...] = jnp.where(x == padding_idx, x, added)
    else:
        o_ref[...] = added


def learned_positional_encoding(x, pos_embed, padding_idx=0):
    """Pallas implementation of LearnedPositionalEncoding.forward.

    x:         (B, S, E) float32
    pos_embed: (max_len, E) float32, max_len >= S
    """
    B, S, E = x.shape
    max_len = pos_embed.shape[0]
    assert max_len >= S, "max_len must be >= seq_len"

    itemsize = jnp.dtype(x.dtype).itemsize
    total_bytes = B * S * E * itemsize
    target_block_bytes = 2 * 1024 * 1024  # ~2 MiB f32 per x block

    if total_bytes <= target_block_bytes:
        # Tiny input: one grid step, whole array in a single block.
        TB, TS = B, S
    else:
        TB = 1
        rows = max(8, target_block_bytes // (E * itemsize))
        if S <= rows:
            TS = S                       # full seq dim (always legal)
        else:
            TS = max(8, (rows // 8) * 8)  # f32 sublane-aligned tile of S

    S_tiles = pl.cdiv(S, TS)
    B_tiles = pl.cdiv(B, TB)

    # Feed pos_embed directly; BlockSpec selects rows.  Only pad (cheap, rare)
    # if a partial last S-tile would index past max_len.
    needed_rows = S_tiles * TS
    if needed_rows > max_len:
        pos_in = jnp.pad(pos_embed, ((0, needed_rows - max_len), (0, 0)))
    else:
        pos_in = pos_embed

    # Bound scoped VMEM explicitly: double-buffered x + out blocks + pos block,
    # with headroom.  Stays <= 48 MiB so it is safe on v7x (64 MiB physical)
    # while raising the 16/32 MiB defaults on v5e/v6e when useful.
    x_blk = TB * TS * E * itemsize
    pos_blk = TS * E * itemsize
    vmem_bytes = int(1.5 * (2 * x_blk + 2 * x_blk + 2 * pos_blk))
    vmem_bytes = min(48 * 1024 * 1024, max(32 * 1024 * 1024, vmem_bytes))

    kernel = functools.partial(_pos_enc_kernel, padding_idx=padding_idx)
    return pl.pallas_call(
        kernel,
        out_shape=jax.ShapeDtypeStruct((B, S, E), x.dtype),
        # Batch innermost: consecutive steps keep the same pos block index,
        # so the pos table tile is not re-fetched per batch row.
        grid=(S_tiles, B_tiles),
        in_specs=[
            pl.BlockSpec((TB, TS, E), lambda s, b: (b, s, 0)),  # x
            pl.BlockSpec((TS, E), lambda s, b: (s, 0)),         # pos table rows
        ],
        out_specs=pl.BlockSpec((TB, TS, E), lambda s, b: (b, s, 0)),
        compiler_params=pltpu.CompilerParams(
            dimension_semantics=("parallel", "parallel"),
            vmem_limit_bytes=vmem_bytes,
        ),
    )(x, pos_in)


def _reference(x, pos_embed, padding_idx=0):
    S = x.shape[1]
    added = x + pos_embed[:S, :][None, :, :]
    if padding_idx is not None:
        return jnp.where(x == padding_idx, x, added)
    return added


if __name__ == "__main__":
    key = jax.random.PRNGKey(0)
    k_pos, k_x, k_mask, k_pos2, k_x2 = jax.random.split(key, 5)

    # --- test 1: padding_idx path, E lane-dense ---------------------------
    B, S, E = 2, 8, 128
    MAX_LEN = 16
    PADDING_IDX = 0

    # deterministic parameter init: normal(mean=0, std=0.1), as in _init_embeddings
    pos_embed = 0.1 * jax.random.normal(k_pos, (MAX_LEN, E), dtype=jnp.float32)

    # input with some exact zeros so the padding_idx branch is exercised
    x = jax.random.normal(k_x, (B, S, E), dtype=jnp.float32)
    zero_mask = jax.random.bernoulli(k_mask, p=0.25, shape=(B, S, E))
    x = jnp.where(zero_mask, jnp.zeros_like(x), x)

    out = learned_positional_encoding(x, pos_embed, padding_idx=PADDING_IDX)
    out = jax.block_until_ready(out)
    ref = _reference(x, pos_embed, padding_idx=PADDING_IDX)
    assert out.shape == (B, S, E)
    assert jnp.allclose(out, ref, atol=1e-6, rtol=1e-6)

    # --- test 2: padding_idx=None path, odd seq length ---------------------
    B2, S2, E2 = 3, 13, 128
    MAX_LEN2 = 32
    pos_embed2 = 0.1 * jax.random.normal(k_pos2, (MAX_LEN2, E2), dtype=jnp.float32)
    x2 = jax.random.normal(k_x2, (B2, S2, E2), dtype=jnp.float32)

    out2 = learned_positional_encoding(x2, pos_embed2, padding_idx=None)
    out2 = jax.block_until_ready(out2)
    ref2 = _reference(x2, pos_embed2, padding_idx=None)
    assert out2.shape == (B2, S2, E2)
    assert jnp.allclose(out2, ref2, atol=1e-6, rtol=1e-6)

    print("KERNEL_OK")
</pallas_src>

<mosaic_0001>
module attributes {stable_mosaic.version = 11 : i64} {
  func.func @_pos_enc_kernel(%arg0: i32, %arg1: i32, %arg2: memref<2x8x128xf32, #tpu.memory_space<vmem>>, %arg3: memref<8x128xf32, #tpu.memory_space<vmem>>, %arg4: memref<2x8x128xf32, #tpu.memory_space<vmem>>) attributes {dimension_semantics = [#tpu.dimension_semantics<parallel>, #tpu.dimension_semantics<parallel>], iteration_bounds = array<i64: 1, 1>, scalar_prefetch = 0 : i64, scratch_operands = 0 : i64, tpu.core_type = #tpu.core_type<tc>, window_params = [{transform_indices = @transform_0, window_bounds = array<i64: 2, 8, 128>}, {transform_indices = @transform_1, window_bounds = array<i64: 8, 128>}, {transform_indices = @transform_2, window_bounds = array<i64: 2, 8, 128>}]} {
    %c0 = arith.constant 0 : index
    %c0_0 = arith.constant 0 : index
    %c0_1 = arith.constant 0 : index
    %0 = vector.load %arg2[%c0, %c0_0, %c0_1] : memref<2x8x128xf32, #tpu.memory_space<vmem>>, vector<2x8x128xf32>
    %c0_2 = arith.constant 0 : index
    %c0_3 = arith.constant 0 : index
    %1 = vector.load %arg3[%c0_2, %c0_3] : memref<8x128xf32, #tpu.memory_space<vmem>>, vector<8x128xf32>
    %2 = vector.shape_cast %1 : vector<8x128xf32> to vector<1x8x128xf32>
    %3 = vector.broadcast %2 : vector<1x8x128xf32> to vector<2x8x128xf32>
    %4 = arith.addf %0, %3 : vector<2x8x128xf32>
    %cst = arith.constant 0.000000e+00 : f32
    %5 = vector.broadcast %cst : f32 to vector<2x8x128xf32>
    %6 = arith.cmpf oeq, %0, %5 : vector<2x8x128xf32>
    %7 = arith.select %6, %0, %4 : vector<2x8x128xi1>, vector<2x8x128xf32>
    %c0_4 = arith.constant 0 : index
    %c0_5 = arith.constant 0 : index
    %c0_6 = arith.constant 0 : index
    %8 = vector.load %arg4[%c0_4, %c0_5, %c0_6] : memref<2x8x128xf32, #tpu.memory_space<vmem>>, vector<2x8x128xf32>
    tpu.vector_store %arg4[%c0_4, %c0_5, %c0_6], %7 {strides = array<i32>} : memref<2x8x128xf32, #tpu.memory_space<vmem>>, vector<2x8x128xf32>,
    return
  }
  func.func @transform_0(%arg0: i32, %arg1: i32) -> (i32, i32, i32) {
    %c0_i32 = arith.constant 0 : i32
    %c0_i32_0 = arith.constant 0 : i32
    return %arg1, %arg0, %c0_i32 : i32, i32, i32
  }
  func.func @transform_1(%arg0: i32, %arg1: i32) -> (i32, i32) {
    %c0_i32 = arith.constant 0 : i32
    %c0_i32_0 = arith.constant 0 : i32
    return %arg0, %c0_i32 : i32, i32
  }
  func.func @transform_2(%arg0: i32, %arg1: i32) -> (i32, i32, i32) {
    %c0_i32 = arith.constant 0 : i32
    %c0_i32_0 = arith.constant 0 : i32
    return %arg1, %arg0, %c0_i32 : i32, i32, i32
  }
}

</mosaic_0001>

<llo_original>
// kernel: tpu_custom_call.1
$region0: #{tpu_custom_call.1}
  #allocation0 [shape = 'u32[]', space=smem, size = 0x4, offset = 0x4, fixed_abs, tag = 'smem constant byte address 0x4 - core index']
  #allocation1 [shape = 'u32[144,128]{1,0:T(1,128)}', space=vmem, size = 0x12000, scoped, tag = 'internal scratch']
  %s0 = inlined_call_operand.hbm [shape: f32[2,8,128], index: 0, kind: input, shape index: {}]
  %s1 = inlined_call_operand.hbm [shape: f32[16,128], index: 1, kind: input, shape index: {}]
  %s2 = inlined_call_operand.hbm [shape: f32[2,8,128], index: 2, kind: output, shape index: {}]
  %s3 = sld [smem:[#allocation0]]
  $region26: #{tpu_custom_call.1} parent=0
    _
  %s5 = ssub.s32 1, %s3
  %s6 = scalar_select 0, %s5, %s3
  $region1: #{tpu_custom_call.1} parent=0
    #allocation2 [shape = 'u8[8192]{0}', space=vmem, size = 0x2000, scoped, tag = 'input window, operand 0, single buffered']
    #allocation3 [shape = 's32[1]{0}', space=sflag, size = 0x4, scoped, tag = 'scoped memory for tpu_custom_call.1']
    #allocation4 [shape = 's32[1]{0}', space=sflag, size = 0x4, scoped, tag = 'scoped memory for tpu_custom_call.1']
    #allocation5 [shape = 'u8[4096]{0}', space=vmem, size = 0x1000, scoped, tag = 'input window, operand 1, single buffered']
    #allocation6 [shape = 's32[1]{0}', space=sflag, size = 0x4, scoped, tag = 'scoped memory for tpu_custom_call.1']
    #allocation7 [shape = 'u8[8192]{0}', space=vmem, size = 0x2000, scoped, tag = 'output window, operand 0, single buffered']
    %7 = vsyncpa [#allocation3], 0
    %8 = vsyncpa [#allocation6], 0
    %9 = vsyncpa [#allocation4], 0
    // Predicated region
    $region2: #{tpu_custom_call.1} parent=1 // pred_check
      _
    $region3: #{tpu_custom_call.1} parent=1 // pred_check_branch
      %11 = sbr.rel (0) target = $region5
    $region4: #{tpu_custom_call.1} parent=1 // pred_region
      %s13 = ssub.s32 256, 256
      %14 = vsyncadd [#allocation3], %s13
      %s15 = sshll.u32 [#allocation2], 4
      %s16 = int_to_ptr.vmem [resolvable:$true] %s15
      %21 = dma.hbm_to_vmem [thread:$0]  %s0, 256, %s16, [#allocation3], 128, 128, 8
    $region5: #{tpu_custom_call.1} parent=1 // pred_fallthru
      _
    // Predicated region
    $region6: #{tpu_custom_call.1} parent=1 // pred_check
      _
    $region7: #{tpu_custom_call.1} parent=1 // pred_check_branch
      %23 = sbr.rel (0) target = $region9
    $region8: #{tpu_custom_call.1} parent=1 // pred_region
      %s25 = ssub.s32 128, 128
      %26 = vsyncadd [#allocation6], %s25
      %s28 = sshll.u32 [#allocation5], 4
      %s29 = int_to_ptr.vmem [resolvable:$true] %s28
      %31 = dma.hbm_to_vmem [thread:$0]  %s1, 128, %s29, [#allocation6]
    $region9: #{tpu_custom_call.1} parent=1 // pred_fallthru
      _
    // Predicated region
    $region10: #{tpu_custom_call.1} parent=1 // pred_check
      _
    $region11: #{tpu_custom_call.1} parent=1 // pred_check_branch
      %33 = sbr.rel (0) target = $region13
    $region12: #{tpu_custom_call.1} parent=1 // pred_region
      %34 = dma.done [#allocation3], 256
    $region13: #{tpu_custom_call.1} parent=1 // pred_fallthru
      _
    // Predicated region
    $region14: #{tpu_custom_call.1} parent=1 // pred_check
      _
    $region15: #{tpu_custom_call.1} parent=1 // pred_check_branch
      %36 = sbr.rel (0) target = $region17
    $region16: #{tpu_custom_call.1} parent=1 // pred_region
      %37 = dma.done [#allocation6], 128
    $region17: #{tpu_custom_call.1} parent=1 // pred_fallthru
      _
    %v38 = vld [vmem:[#allocation2] sm:$0xff]
    %v39 = vld [vmem:[#allocation2 + $0x8] sm:$0xff]
    %v40 = vld [vmem:[#allocation5] sm:$0xff]
    %v41 = vadd.f32 %v38, %v40
    %v42 = vadd.f32 %v39, %v40
    %vm43 = vcmp.eq.f32.partialorder %v38, 0.0
    %vm44 = vcmp.eq.f32.partialorder %v39, 0.0
    %v45 = vsel %vm43, %v38, %v41
    %v46 = vsel %vm44, %v39, %v42
    %47 = vst [vmem:[#allocation7] sm:$0xff] %v45
    %48 = vst [vmem:[#allocation7 + $0x8] sm:$0xff] %v46
    // Predicated region
    $region18: #{tpu_custom_call.1} parent=1 // pred_check
      _
    $region19: #{tpu_custom_call.1} parent=1 // pred_check_branch
      %50 = sbr.rel (0) target = $region21
    $region20: #{tpu_custom_call.1} parent=1 // pred_region
      %s52 = ssub.s32 256, 256
      %53 = vsyncadd [#allocation4], %s52
      %s54 = sshll.u32 [#allocation7], 4
      %s55 = int_to_ptr.vmem [resolvable:$true] %s54
      %60 = dma.vmem_to_hbm [thread:$0]  %s55, 256, %s2, [#allocation4], 128, 128, 8
    $region21: #{tpu_custom_call.1} parent=1 // pred_fallthru
      _
    // Predicated region
    $region22: #{tpu_custom_call.1} parent=1 // pred_check
      _
    $region23: #{tpu_custom_call.1} parent=1 // pred_check_branch
      %62 = sbr.rel (0) target = $region25
    $region24: #{tpu_custom_call.1} parent=1 // pred_region
      %63 = dma.done [#allocation4], 256
    $region25: #{tpu_custom_call.1} parent=1 // pred_fallthru
      _
    %64 = vsyncpa [#allocation3], 1
    %65 = vsyncpa [#allocation6], 1
    %66 = vsyncpa [#allocation4], 1

</llo_original>
